<compile_context>
chip_gen: v6e
topology: v6e:2x2x1
jax: 0.10.0
libtpu: 0.0.40
codegen_flags: <defaults>
</compile_context>

<pallas_src>
import jax
import jax.numpy as jnp
from jax.experimental import pallas as pl
from jax.experimental.pallas import tpu as pltpu


def autoencoder_kernel(x_ref, w1_ref, b1_ref, w2_ref, b2_ref, o_ref):
    # hidden = Threshold(1e-5, 0)( x @ W1 + b1 )   (f32 accumulate)
    x = x_ref[...].astype(jnp.float32)
    h = jnp.dot(x, w1_ref[...], preferred_element_type=jnp.float32)
    h = h + b1_ref[...]                       # b1 is (1, Hp) f32
    h = jnp.where(h > 1e-5, h, 0.0)           # Threshold(1e-5, 0); ReLU is a no-op

    # out = hidden @ W2 + b2
    y = jnp.dot(h, w2_ref[...], preferred_element_type=jnp.float32)
    y = y + b2_ref[...]                       # b2 is (1, D) f32
    o_ref[...] = y.astype(o_ref.dtype)        # store directly in caller dtype


def _round_up(n: int, m: int) -> int:
    return ((n + m - 1) // m) * m


def autoencoder_forward(x, w1, b1, w2, b2, *, block_b=2048):
    """x: [B, D]; w1: [D, H]; b1: [1, H] or [H]; w2: [H, D]; b2: [1, D] or [D]."""
    B, D = x.shape
    H = w1.shape[1]
    out_dtype = x.dtype

    # Pad only the tiny parameters: hidden dim -> multiple of 128 lanes.
    # Zero padding preserves the math (padded hidden columns are exactly 0
    # after bias=0 and the threshold, and the padded w2 rows are 0).
    Hp = _round_up(H, 128)
    f32 = jnp.float32
    w1p = jnp.pad(w1.astype(f32), ((0, 0), (0, Hp - H)))
    b1p = jnp.pad(jnp.reshape(b1, (1, H)).astype(f32), ((0, 0), (0, Hp - H)))
    w2p = jnp.pad(w2.astype(f32), ((0, Hp - H), (0, 0)))
    b2p = jnp.reshape(b2, (1, D)).astype(f32)

    if B <= block_b:
        # Small batch: everything resident in VMEM, no grid (no per-step cost).
        return pl.pallas_call(
            autoencoder_kernel,
            out_shape=jax.ShapeDtypeStruct((B, D), out_dtype),
            in_specs=[pl.BlockSpec(memory_space=pltpu.MemorySpace.VMEM)] * 5,
            out_specs=pl.BlockSpec(memory_space=pltpu.MemorySpace.VMEM),
        )(x, w1p, b1p, w2p, b2p)

    # Large batch: 1-D grid over batch tiles; weights/biases stay resident
    # (constant index_map). Cap the tile so the grid has >= 2 steps, letting
    # the "parallel" axis shard across v7x's two TensorCores.
    blk = max(8, min(block_b, _round_up((B + 1) // 2, 8)))
    grid = (pl.cdiv(B, blk),)

    # Right-size the scoped VMEM request: double-buffered x/out tiles plus
    # the (double-buffered) resident weights, with a few MiB of margin.
    x_bytes = blk * D * jnp.dtype(x.dtype).itemsize
    o_bytes = blk * D * jnp.dtype(out_dtype).itemsize
    w_bytes = (D * Hp + Hp * D + Hp + D) * 4
    vmem_limit = int(min(48 * 2**20,
                         max(16 * 2**20,
                             2 * (x_bytes + o_bytes) + 2 * w_bytes + 4 * 2**20)))

    return pl.pallas_call(
        autoencoder_kernel,
        out_shape=jax.ShapeDtypeStruct((B, D), out_dtype),
        grid=grid,
        in_specs=[
            pl.BlockSpec((blk, D), lambda i: (i, 0)),   # x tile (original dtype)
            pl.BlockSpec((D, Hp), lambda i: (0, 0)),    # w1 (resident)
            pl.BlockSpec((1, Hp), lambda i: (0, 0)),    # b1 (resident)
            pl.BlockSpec((Hp, D), lambda i: (0, 0)),    # w2 (resident)
            pl.BlockSpec((1, D), lambda i: (0, 0)),     # b2 (resident)
        ],
        out_specs=pl.BlockSpec((blk, D), lambda i: (i, 0)),
        compiler_params=pltpu.CompilerParams(
            dimension_semantics=("parallel",),
            vmem_limit_bytes=vmem_limit,
        ),
    )(x, w1p, b1p, w2p, b2p)


if __name__ == "__main__":
    # Small, deterministic shapes consistent with the module's forward:
    #   batch=8, input_size=64, hidden_size=32
    batch, input_size, hidden_size = 8, 64, 32

    key = jax.random.PRNGKey(0)
    kx, kw1, kb1, kw2, kb2 = jax.random.split(key, 5)

    x = jax.random.normal(kx, (batch, input_size), dtype=jnp.float32)

    # Deterministic parameter init (uniform, like PyTorch's Linear default).
    bound1 = 1.0 / (input_size ** 0.5)
    w1 = jax.random.uniform(kw1, (input_size, hidden_size), jnp.float32,
                            -bound1, bound1)
    b1 = jax.random.uniform(kb1, (1, hidden_size), jnp.float32, -bound1, bound1)

    bound2 = 1.0 / (hidden_size ** 0.5)
    w2 = jax.random.uniform(kw2, (hidden_size, input_size), jnp.float32,
                            -bound2, bound2)
    b2 = jax.random.uniform(kb2, (1, input_size), jnp.float32, -bound2, bound2)

    # Pure-JAX reference of the module's forward.
    def ref_forward(xr, w1r, b1r, w2r, b2r):
        h = jnp.dot(xr, w1r, preferred_element_type=jnp.float32) + b1r
        h = jnp.where(h > 1e-5, h, 0.0)        # Threshold(1e-5, 0)
        h = jnp.maximum(h, 0.0)                # ReLU (no-op here)
        y = jnp.dot(h, w2r, preferred_element_type=jnp.float32) + b2r
        return y

    # --- small batch: no-grid, fully-resident path ---
    out = jax.block_until_ready(autoencoder_forward(x, w1, b1, w2, b2))
    ref = ref_forward(x, w1, b1, w2, b2)
    assert out.shape == (batch, input_size)
    assert out.dtype == x.dtype
    assert jnp.allclose(out, ref, atol=2e-2, rtol=2e-2)

    # --- larger batch: exercises the batch-tiled grid path, >=2 grid steps
    #     and a partial (masked) trailing tile, with no wrapper pad/slice ---
    B2 = 3000
    x2 = jax.random.normal(jax.random.PRNGKey(1), (B2, input_size),
                           dtype=jnp.float32)
    out2 = jax.block_until_ready(
        autoencoder_forward(x2, w1, b1, w2, b2, block_b=2048))
    ref2 = ref_forward(x2, w1, b1, w2, b2)
    assert out2.shape == (B2, input_size)
    assert jnp.allclose(out2, ref2, atol=2e-2, rtol=2e-2)

    print("KERNEL_OK")
</pallas_src>

<mosaic_0001>
module attributes {stable_mosaic.version = 11 : i64} {
  func.func @autoencoder_kernel(%arg0: memref<8x64xf32, #tpu.memory_space<vmem>>, %arg1: memref<64x128xf32, #tpu.memory_space<vmem>>, %arg2: memref<1x128xf32, #tpu.memory_space<vmem>>, %arg3: memref<128x64xf32, #tpu.memory_space<vmem>>, %arg4: memref<1x64xf32, #tpu.memory_space<vmem>>, %arg5: memref<8x64xf32, #tpu.memory_space<vmem>>) attributes {dimension_semantics = [], scalar_prefetch = 0 : i64, scratch_operands = 0 : i64, tpu.core_type = #tpu.core_type<tc>} {
    %c0 = arith.constant 0 : index
    %c0_0 = arith.constant 0 : index
    %0 = vector.load %arg0[%c0, %c0_0] : memref<8x64xf32, #tpu.memory_space<vmem>>, vector<8x64xf32>
    %c0_1 = arith.constant 0 : index
    %c0_2 = arith.constant 0 : index
    %1 = vector.load %arg1[%c0_1, %c0_2] : memref<64x128xf32, #tpu.memory_space<vmem>>, vector<64x128xf32>
    %cst = arith.constant dense<0.000000e+00> : vector<8x128xf32>
    %2 = tpu.matmul %0, %1, %cst {dimension_numbers = #tpu.dot_dimension_numbers<[1], [0], [0], [1], [0, 0, 1, 1], [], []>} : vector<8x64xf32>, vector<64x128xf32>, vector<8x128xf32> -> vector<8x128xf32>
    %c0_3 = arith.constant 0 : index
    %c0_4 = arith.constant 0 : index
    %3 = vector.load %arg2[%c0_3, %c0_4] : memref<1x128xf32, #tpu.memory_space<vmem>>, vector<1x128xf32>
    %4 = vector.broadcast %3 : vector<1x128xf32> to vector<8x128xf32>
    %5 = arith.addf %2, %4 : vector<8x128xf32>
    %cst_5 = arith.constant 9.99999974E-6 : f32
    %6 = vector.broadcast %cst_5 : f32 to vector<8x128xf32>
    %7 = arith.cmpf ogt, %5, %6 : vector<8x128xf32>
    %cst_6 = arith.constant 0.000000e+00 : f32
    %8 = vector.broadcast %cst_6 : f32 to vector<8x128xf32>
    %9 = arith.select %7, %5, %8 : vector<8x128xi1>, vector<8x128xf32>
    %c0_7 = arith.constant 0 : index
    %c0_8 = arith.constant 0 : index
    %10 = vector.load %arg3[%c0_7, %c0_8] : memref<128x64xf32, #tpu.memory_space<vmem>>, vector<128x64xf32>
    %cst_9 = arith.constant dense<0.000000e+00> : vector<8x64xf32>
    %11 = tpu.matmul %9, %10, %cst_9 {dimension_numbers = #tpu.dot_dimension_numbers<[1], [0], [0], [1], [0, 0, 1, 1], [], []>} : vector<8x128xf32>, vector<128x64xf32>, vector<8x64xf32> -> vector<8x64xf32>
    %c0_10 = arith.constant 0 : index
    %c0_11 = arith.constant 0 : index
    %12 = vector.load %arg4[%c0_10, %c0_11] : memref<1x64xf32, #tpu.memory_space<vmem>>, vector<1x64xf32>
    %13 = vector.broadcast %12 : vector<1x64xf32> to vector<8x64xf32>
    %14 = arith.addf %11, %13 : vector<8x64xf32>
    %c0_12 = arith.constant 0 : index
    %c0_13 = arith.constant 0 : index
    %15 = vector.load %arg5[%c0_12, %c0_13] : memref<8x64xf32, #tpu.memory_space<vmem>>, vector<8x64xf32>
    tpu.vector_store %arg5[%c0_12, %c0_13], %14 {strides = array<i32>} : memref<8x64xf32, #tpu.memory_space<vmem>>, vector<8x64xf32>,
    return
  }
}

</mosaic_0001>

<llo_original>
// kernel: tpu_custom_call.1
$region0: #{tpu_custom_call.1}
  #allocation0 [shape = 'u32[]', space=smem, size = 0x4, offset = 0x4, fixed_abs, tag = 'smem constant byte address 0x4 - core index']
  #allocation1 [shape = 'u32[144,128]{1,0:T(1,128)}', space=vmem, size = 0x12000, scoped, tag = 'internal scratch']
  %s0 = inlined_call_operand.vmem [shape: f32[8,64], index: 0, kind: input, shape index: {}]
  %s1 = inlined_call_operand.vmem [shape: f32[64,128], index: 1, kind: input, shape index: {}]
  %s2 = inlined_call_operand.vmem [shape: f32[1,128], index: 2, kind: input, shape index: {}]
  %s3 = inlined_call_operand.vmem [shape: f32[128,64], index: 3, kind: input, shape index: {}]
  %s4 = inlined_call_operand.vmem [shape: f32[1,64], index: 4, kind: input, shape index: {}]
  %s5 = inlined_call_operand.hbm [shape: f32[8,64], index: 5, kind: output, shape index: {}]
  %s6 = sld [smem:[#allocation0]]
  $region30: #{tpu_custom_call.1} parent=0
    _
  %s8 = ssub.s32 1, %s6
  %s9 = scalar_select 0, %s8, %s6
  $region1: #{tpu_custom_call.1} parent=0
    #allocation2 [shape = 'u8[4096]{0}', space=vmem, size = 0x1000, scoped, tag = 'output window, operand 0, single buffered']
    #allocation3 [shape = 's32[1]{0}', space=sflag, size = 0x4, scoped, tag = 'scoped memory for tpu_custom_call.1']
    %10 = vsyncpa [#allocation3], 0
    // Predicated region
    $region2: #{tpu_custom_call.1} parent=1 // pred_check
      _
    $region3: #{tpu_custom_call.1} parent=1 // pred_check_branch
      %12 = sbr.rel (0) target = $region5
    $region4: #{tpu_custom_call.1} parent=1 // pred_region
      _
    $region5: #{tpu_custom_call.1} parent=1 // pred_fallthru
      _
    // Predicated region
    $region6: #{tpu_custom_call.1} parent=1 // pred_check
      _
    $region7: #{tpu_custom_call.1} parent=1 // pred_check_branch
      %14 = sbr.rel (0) target = $region9
    $region8: #{tpu_custom_call.1} parent=1 // pred_region
      _
    $region9: #{tpu_custom_call.1} parent=1 // pred_fallthru
      _
    // Predicated region
    $region10: #{tpu_custom_call.1} parent=1 // pred_check
      _
    $region11: #{tpu_custom_call.1} parent=1 // pred_check_branch
      %16 = sbr.rel (0) target = $region13
    $region12: #{tpu_custom_call.1} parent=1 // pred_region
      _
    $region13: #{tpu_custom_call.1} parent=1 // pred_fallthru
      _
    // Predicated region
    $region14: #{tpu_custom_call.1} parent=1 // pred_check
      _
    $region15: #{tpu_custom_call.1} parent=1 // pred_check_branch
      %18 = sbr.rel (0) target = $region17
    $region16: #{tpu_custom_call.1} parent=1 // pred_region
      _
    $region17: #{tpu_custom_call.1} parent=1 // pred_fallthru
      _
    // Predicated region
    $region18: #{tpu_custom_call.1} parent=1 // pred_check
      _
    $region19: #{tpu_custom_call.1} parent=1 // pred_check_branch
      %20 = sbr.rel (0) target = $region21
    $region20: #{tpu_custom_call.1} parent=1 // pred_region
      _
    $region21: #{tpu_custom_call.1} parent=1 // pred_fallthru
      _
    %v21 = vld [vmem:[%s0] sm:$0xff]
    %v22 = vld [vmem:[%s1] sm:$0xff]
    %v23 = vld [vmem:[%s1 + $0x8] sm:$0xff]
    %v24 = vld [vmem:[%s1 + $0x10] sm:$0xff]
    %v25 = vld [vmem:[%s1 + $0x18] sm:$0xff]
    %v26 = vld [vmem:[%s1 + $0x20] sm:$0xff]
    %v27 = vld [vmem:[%s1 + $0x28] sm:$0xff]
    %v28 = vld [vmem:[%s1 + $0x30] sm:$0xff]
    %v29 = vld [vmem:[%s1 + $0x38] sm:$0xff]
    %v30 = vld [vmem:[%s2] sm:$0x1]
    %v32 = vlaneseq
    %v33 = vshrl.u32 %v32, 7
    %v34 = vsub.s32 0, %v33
    %v35 = vrot.slane %v30, %v34
    %vm37 = vcmask 523264
    %v39 = vsel %vm37, %v21, 0
    %41 = vmatprep.subr.mxu0 0.0
    %42 = vmatpush1.msra.mxu0 0.0
    %43 = vmatprep.subr.mxu0 0.0
    %44 = vmatpush1.msra.mxu0 0.0
    %45 = vmatprep.subr.mxu0 0.0
    %46 = vmatpush1.msra.mxu0 0.0
    %47 = vmatprep.subr.mxu0 0.0
    %48 = vmatpush1.msra.mxu0 0.0
    %49 = vmatprep.subr.mxu0 0.0
    %50 = vmatpush1.msra.mxu0 0.0
    %51 = vmatprep.subr.mxu0 0.0
    %52 = vmatpush1.msra.mxu0 0.0
    %53 = vmatprep.subr.mxu0 0.0
    %54 = vmatpush1.msra.mxu0 0.0
    %55 = vmatprep.subr.mxu0 0.0
    %56 = vmatpush1.msra.mxu0 0.0
    %57 = vmatprep.subr.mxu0 0.0
    %58 = vmatpush1.msra.mxu0 %v29
    %59 = vmatprep.subr.mxu0 0.0
    %60 = vmatpush1.msra.mxu0 %v28
    %61 = vmatprep.subr.mxu0 0.0
    %62 = vmatpush1.msra.mxu0 %v27
    %63 = vmatprep.subr.mxu0 0.0
    %64 = vmatpush1.msra.mxu0 %v26
    %65 = vmatprep.subr.mxu0 0.0
    %66 = vmatpush1.msra.mxu0 %v25
    %67 = vmatprep.subr.mxu0 0.0
    %68 = vmatpush1.msra.mxu0 %v24
    %69 = vmatprep.subr.mxu0 0.0
    %70 = vmatpush1.msra.mxu0 %v23
    %71 = vmatprep.subr.mxu0 0.0
    %72 = vmatpush1.msra.mxu0 %v22
    %73 = vmatprep.subr.mxu0 0.0
    %74 = vmatpush2.msra.mxu0 0.0
    %75 = vmatprep.subr.mxu0 0.0
    %76 = vmatpush2.msra.mxu0 0.0
    %77 = vmatprep.subr.mxu0 0.0
    %78 = vmatpush2.msra.mxu0 0.0
    %79 = vmatprep.subr.mxu0 0.0
    %80 = vmatpush2.msra.mxu0 0.0
    %81 = vmatprep.subr.mxu0 0.0
    %82 = vmatpush2.msra.mxu0 0.0
    %83 = vmatprep.subr.mxu0 0.0
    %84 = vmatpush2.msra.mxu0 0.0
    %85 = vmatprep.subr.mxu0 0.0
    %86 = vmatpush2.msra.mxu0 0.0
    %87 = vmatprep.subr.mxu0 0.0
    %88 = vmatpush2.msra.mxu0 0.0
    %89 = vmatprep.subr.mxu0 0.0
    %90 = vmatpush2.msra.mxu0 0.0
    %91 = vmatprep.subr.mxu0 0.0
    %92 = vmatpush2.msra.mxu0 0.0
    %93 = vmatprep.subr.mxu0 0.0
    %94 = vmatpush2.msra.mxu0 0.0
    %95 = vmatprep.subr.mxu0 0.0
    %96 = vmatpush2.msra.mxu0 0.0
    %97 = vmatprep.subr.mxu0 0.0
    %98 = vmatpush2.msra.mxu0 0.0
    %99 = vmatprep.subr.mxu0 0.0
    %100 = vmatpush2.msra.mxu0 0.0
    %101 = vmatprep.subr.mxu0 0.0
    %102 = vmatpush2.msra.mxu0 0.0
    %103 = vmatprep.subr.mxu0 0.0
    %104 = vmatpush2.msra.mxu0 0.0
    %105 = vmatprep.mubr.f32.mxu0 0.0
    %106 = vmatmul.mubr.f32.gmra.mxu0 %v39
    %v107 = vpop.f32.mrf.mxu0
    %v108 = vadd.f32 %v35, %v107
    %v109 = vpop.f32.mrf.mxu0
    %110 = vdwg.mxu0
    %vm111 = vcmp.gt.f32.partialorder %v108, 1e-05
    %v112 = vsel %vm111, %v108, 0.0
    %v113 = vld [vmem:[%s3] sm:$0xff]
    %v114 = vld [vmem:[%s3 + $0x8] sm:$0xff]
    %v115 = vld [vmem:[%s3 + $0x10] sm:$0xff]
    %v116 = vld [vmem:[%s3 + $0x18] sm:$0xff]
    %v117 = vld [vmem:[%s3 + $0x20] sm:$0xff]
    %v118 = vld [vmem:[%s3 + $0x28] sm:$0xff]
    %v119 = vld [vmem:[%s3 + $0x30] sm:$0xff]
    %v120 = vld [vmem:[%s3 + $0x38] sm:$0xff]
    %v121 = vld [vmem:[%s3 + $0x40] sm:$0xff]
    %v122 = vld [vmem:[%s3 + $0x48] sm:$0xff]
    %v123 = vld [vmem:[%s3 + $0x50] sm:$0xff]
    %v124 = vld [vmem:[%s3 + $0x58] sm:$0xff]
    %v125 = vld [vmem:[%s3 + $0x60] sm:$0xff]
    %v126 = vld [vmem:[%s3 + $0x68] sm:$0xff]
    %v127 = vld [vmem:[%s3 + $0x70] sm:$0xff]
    %v128 = vld [vmem:[%s3 + $0x78] sm:$0xff]
    %v129 = vld [vmem:[%s4] sm:$0x1]
    %v131 = vlaneseq
    %v132 = vshrl.u32 %v131, 7
    %v133 = vsub.s32 0, %v132
    %v134 = vrot.slane %v129, %v133
    %136 = vmatprep.subr.mxu0 0.0
    %137 = vmatpush1.msra.mxu0 %v128
    %138 = vmatprep.subr.mxu0 0.0
    %139 = vmatpush1.msra.mxu0 %v127
    %140 = vmatprep.subr.mxu0 0.0
    %141 = vmatpush1.msra.mxu0 %v126
    %142 = vmatprep.subr.mxu0 0.0
    %143 = vmatpush1.msra.mxu0 %v125
    %144 = vmatprep.subr.mxu0 0.0
    %145 = vmatpush1.msra.mxu0 %v124
    %146 = vmatprep.subr.mxu0 0.0
    %147 = vmatpush1.msra.mxu0 %v123
    %148 = vmatprep.subr.mxu0 0.0
    %149 = vmatpush1.msra.mxu0 %v122
    %150 = vmatprep.subr.mxu0 0.0
    %151 = vmatpush1.msra.mxu0 %v121
    %152 = vmatprep.subr.mxu0 0.0
    %153 = vmatpush1.msra.mxu0 %v120
    %154 = vmatprep.subr.mxu0 0.0
    %155 = vmatpush1.msra.mxu0 %v119
    %156 = vmatprep.subr.mxu0 0.0
    %157 = vmatpush1.msra.mxu0 %v118
    %158 = vmatprep.subr.mxu0 0.0
    %159 = vmatpush1.msra.mxu0 %v117
    %160 = vmatprep.subr.mxu0 0.0
    %161 = vmatpush1.msra.mxu0 %v116
    %162 = vmatprep.subr.mxu0 0.0
    %163 = vmatpush1.msra.mxu0 %v115
    %164 = vmatprep.subr.mxu0 0.0
    %165 = vmatpush1.msra.mxu0 %v114
    %166 = vmatprep.subr.mxu0 0.0
    %167 = vmatpush1.msra.mxu0 %v113
    %168 = vmatprep.subr.mxu0 0.0
    %169 = vmatpush2.msra.mxu0 0.0
    %170 = vmatprep.subr.mxu0 0.0
    %171 = vmatpush2.msra.mxu0 0.0
    %172 = vmatprep.subr.mxu0 0.0
    %173 = vmatpush2.msra.mxu0 0.0
    %174 = vmatprep.subr.mxu0 0.0
    %175 = vmatpush2.msra.mxu0 0.0
    %176 = vmatprep.subr.mxu0 0.0
    %177 = vmatpush2.msra.mxu0 0.0
    %178 = vmatprep.subr.mxu0 0.0
    %179 = vmatpush2.msra.mxu0 0.0
    %180 = vmatprep.subr.mxu0 0.0
    %181 = vmatpush2.msra.mxu0 0.0
    %182 = vmatprep.subr.mxu0 0.0
    %183 = vmatpush2.msra.mxu0 0.0
    %184 = vmatprep.subr.mxu0 0.0
    %185 = vmatpush2.msra.mxu0 0.0
    %186 = vmatprep.subr.mxu0 0.0
    %187 = vmatpush2.msra.mxu0 0.0
    %188 = vmatprep.subr.mxu0 0.0
    %189 = vmatpush2.msra.mxu0 0.0
    %190 = vmatprep.subr.mxu0 0.0
    %191 = vmatpush2.msra.mxu0 0.0
    %192 = vmatprep.subr.mxu0 0.0
    %193 = vmatpush2.msra.mxu0 0.0
    %194 = vmatprep.subr.mxu0 0.0
    %195 = vmatpush2.msra.mxu0 0.0
    %196 = vmatprep.subr.mxu0 0.0
    %197 = vmatpush2.msra.mxu0 0.0
    %198 = vmatprep.subr.mxu0 0.0
    %199 = vmatpush2.msra.mxu0 0.0
    %200 = vmatprep.mubr.f32.mxu0 0.0
    %201 = vmatmul.mubr.f32.gmra.mxu0 %v112
    %v202 = vpop.f32.mrf.mxu0
    %v203 = vadd.f32 %v134, %v202
    %v204 = vpop.f32.mrf.mxu0
    %205 = vdwg.mxu0
    %206 = vst.msk [vmem:[#allocation2] sm:$0xff] %vm37, %v203
    // Predicated region
    $region22: #{tpu_custom_call.1} parent=1 // pred_check
      _
    $region23: #{tpu_custom_call.1} parent=1 // pred_check_branch
      %208 = sbr.rel (0) target = $region25
    $region24: #{tpu_custom_call.1} parent=1 // pred_region
      %s210 = ssub.s32 128, 128
      %211 = vsyncadd [#allocation3], %s210
      %s213 = sshll.u32 [#allocation2], 4
      %s214 = int_to_ptr.vmem [resolvable:$true] %s213
      %216 = dma.vmem_to_hbm [thread:$0]  %s214, 128, %s5, [#allocation3]
    $region25: #{tpu_custom_call.1} parent=1 // pred_fallthru
      _
    // Predicated region
    $region26: #{tpu_custom_call.1} parent=1 // pred_check
      _
    $region27: #{tpu_custom_call.1} parent=1 // pred_check_branch
      %218 = sbr.rel (0) target = $region29
    $region28: #{tpu_custom_call.1} parent=1 // pred_region
      %219 = dma.done [#allocation3], 128
    $region29: #{tpu_custom_call.1} parent=1 // pred_fallthru
      _
    %220 = vsyncpa [#allocation3], 1

</llo_original>
